<compile_context>
chip_gen: v7x
topology: tpu7x:2x2x1
jax: 0.10.0
libtpu: 0.0.40
codegen_flags: <defaults>
</compile_context>

<pallas_src>
import functools
import math

import jax
import jax.numpy as jnp
from jax.experimental import pallas as pl
from jax.experimental.pallas import tpu as pltpu


def _cdiv(a: int, b: int) -> int:
    return -(-a // b)


def _round_up(x: int, m: int) -> int:
    return ((x + m - 1) // m) * m


def _static_nonneg_int_power(power):
    """Return int(power) if `power` is a static non-negative integer, else None."""
    if isinstance(power, bool):
        return None
    if isinstance(power, int) and power >= 0:
        return int(power)
    if isinstance(power, float) and power >= 0 and float(power).is_integer():
        return int(power)
    return None


def _relu_power_kernel(x_ref, o_ref, *, power):
    x = x_ref[...]
    # Compute in f32 for non-float inputs (avoids int overflow / truncation).
    compute_dtype = x.dtype if jnp.issubdtype(x.dtype, jnp.floating) else jnp.float32
    r = jnp.maximum(x, 0).astype(compute_dtype)

    p = _static_nonneg_int_power(power)  # static Python hyperparameter
    if p is not None:
        if p == 0:
            y = jnp.ones_like(r)  # matches torch: relu(x) ** 0 == 1
        else:
            # Square-and-multiply: O(log2 p) VPU multiplies instead of a length-p chain.
            y = None
            base = r
            while p > 0:
                if p & 1:
                    y = base if y is None else y * base
                p >>= 1
                if p:
                    base = base * base
    else:
        # Non-integer / negative power: pow via exp/log on the EUP, in f32.
        y = jnp.power(r.astype(jnp.float32), jnp.float32(power))
    o_ref[...] = y.astype(o_ref.dtype)


def relu_power(x, power, *, lane=512, tile_bytes=2 << 20, min_tiles=8):
    """Elementwise relu(x) ** power via a tiled, lane-dense Pallas TPU kernel."""
    orig_shape = x.shape
    orig_dtype = x.dtype
    n = x.size
    if n == 0:
        return x

    itemsize = jnp.dtype(orig_dtype).itemsize
    # dtype-aware sublane multiple (sub-32-bit types pack along sublanes).
    sublane_mult = max(8, 32 // max(itemsize, 1))  # 8 (f32), 16 (bf16), 32 (i8)

    # Pick the widest lane count that divides n, so the common case needs no
    # padding and no output slice (each would be an extra full HBM pass).
    pad = None
    for cand in (lane, 256, 128):
        if n % cand == 0:
            lane, pad = cand, 0
            break
    if pad is None:
        pad = _round_up(n, lane) - n  # ragged tail: pads < one lane row

    rows = _cdiv(n + pad, lane)

    # Tile rows from a byte budget. ~tile_bytes per buffer keeps the pipeline
    # footprint (in + out, double-buffered) around 4 * tile_bytes, which fits
    # scoped-VMEM defaults on v5e (16 MiB) and v6e/v7x (32 MiB).  Also cap so
    # mid-size inputs still produce >= min_tiles grid steps, letting the
    # "parallel" axis shard across v7x's two TensorCores.
    tr_budget = _round_up(max(sublane_mult, tile_bytes // (lane * itemsize)), sublane_mult)
    tr = max(sublane_mult, min(tr_budget, _round_up(_cdiv(rows, min_tiles), sublane_mult)))
    if rows <= tr:
        tr = rows  # single full-extent block (block dim == array dim is always legal)
    grid = (_cdiv(rows, tr),)

    xf = x.reshape(-1)
    if pad:
        # TODO(synk): for ragged sizes a masked-store tail kernel would avoid the
        # pad/slice copies entirely; allow_input_fusion below lets XLA fuse this
        # small pad into the pallas_call operand in the meantime.
        xf = jnp.pad(xf, (0, pad))
    x2d = xf.reshape(rows, lane)

    # Advisory cost: memory-bound elementwise op.
    p_static = _static_nonneg_int_power(power)
    if p_static is not None:
        if p_static <= 1:
            mults = 0
        else:
            mults = (p_static.bit_length() - 1) + (bin(p_static).count("1") - 1)
        flops = n * (1 + mults)
        transcendentals = 0
    else:
        flops = 2 * n
        transcendentals = n
    cost = pl.CostEstimate(
        flops=flops,
        transcendentals=transcendentals,
        bytes_accessed=2 * n * itemsize,
    )

    out = pl.pallas_call(
        functools.partial(_relu_power_kernel, power=power),
        out_shape=jax.ShapeDtypeStruct((rows, lane), orig_dtype),
        grid=grid,
        in_specs=[pl.BlockSpec((tr, lane), lambda i: (i, 0))],
        out_specs=pl.BlockSpec((tr, lane), lambda i: (i, 0)),
        compiler_params=pltpu.CompilerParams(
            dimension_semantics=("parallel",),
            vmem_limit_bytes=32 << 20,
            allow_input_fusion=[True],
        ),
        cost_estimate=cost,
    )(x2d)

    if pad:
        return out.reshape(-1)[:n].reshape(orig_shape)
    return out.reshape(orig_shape)


if __name__ == "__main__":
    key = jax.random.PRNGKey(0)
    # Small NCHW activation-style input, matching the PyTorch module's usage.
    x = jax.random.normal(key, (2, 4, 16, 16), dtype=jnp.float32)

    # Primary case: ReLUPower(power=2). n = 2048 is lane-divisible -> no pad/slice.
    power = 2
    y = jax.block_until_ready(relu_power(x, power))
    ref = jnp.maximum(x, 0.0) ** power
    assert y.shape == x.shape and y.dtype == x.dtype
    assert jnp.allclose(y, ref, atol=1e-6, rtol=1e-6)

    # Odd integer power exercises square-and-multiply.
    y3 = jax.block_until_ready(relu_power(x, 3))
    ref3 = jnp.maximum(x, 0.0) ** 3
    assert jnp.allclose(y3, ref3, atol=1e-6, rtol=1e-6)

    # Non-integer power exercises the pow (EUP) path.
    y_f = jax.block_until_ready(relu_power(x, 2.5))
    ref_f = jnp.maximum(x, 0.0) ** 2.5
    assert jnp.allclose(y_f, ref_f, atol=1e-5, rtol=1e-4)

    # Ragged element count exercises the padded fallback path.
    xr = jax.random.normal(jax.random.PRNGKey(1), (3, 5, 7), dtype=jnp.float32)
    yr = jax.block_until_ready(relu_power(xr, 2))
    refr = jnp.maximum(xr, 0.0) ** 2
    assert yr.shape == xr.shape
    assert jnp.allclose(yr, refr, atol=1e-6, rtol=1e-6)

    print("KERNEL_OK")
</pallas_src>

<mosaic_0001>
module attributes {stable_mosaic.version = 11 : i64} {
  func.func @_relu_power_kernel(%arg0: i32, %arg1: memref<4x512xf32, #tpu.memory_space<vmem>>, %arg2: memref<4x512xf32, #tpu.memory_space<vmem>>) attributes {dimension_semantics = [#tpu.dimension_semantics<parallel>], iteration_bounds = array<i64: 1>, scalar_prefetch = 0 : i64, scratch_operands = 0 : i64, tpu.core_type = #tpu.core_type<tc>, window_params = [{transform_indices = @transform_0, window_bounds = array<i64: 4, 512>}, {transform_indices = @transform_1, window_bounds = array<i64: 4, 512>}]} {
    %c0 = arith.constant 0 : index
    %c0_0 = arith.constant 0 : index
    %0 = vector.load %arg1[%c0, %c0_0] : memref<4x512xf32, #tpu.memory_space<vmem>>, vector<4x512xf32>
    %cst = arith.constant 0.000000e+00 : f32
    %1 = vector.broadcast %cst : f32 to vector<4x512xf32>
    %2 = arith.maximumf %0, %1 : vector<4x512xf32>
    %3 = arith.mulf %2, %2 : vector<4x512xf32>
    %c0_1 = arith.constant 0 : index
    %c0_2 = arith.constant 0 : index
    %4 = vector.load %arg2[%c0_1, %c0_2] : memref<4x512xf32, #tpu.memory_space<vmem>>, vector<4x512xf32>
    tpu.vector_store %arg2[%c0_1, %c0_2], %3 {strides = array<i32>} : memref<4x512xf32, #tpu.memory_space<vmem>>, vector<4x512xf32>,
    return
  }
  func.func @transform_0(%arg0: i32) -> (i32, i32) {
    %c0_i32 = arith.constant 0 : i32
    %c0_i32_0 = arith.constant 0 : i32
    return %arg0, %c0_i32 : i32, i32
  }
  func.func @transform_1(%arg0: i32) -> (i32, i32) {
    %c0_i32 = arith.constant 0 : i32
    %c0_i32_0 = arith.constant 0 : i32
    return %arg0, %c0_i32 : i32, i32
  }
}

</mosaic_0001>

<llo_original>
// kernel: tpu_custom_call.1
$region0: #{tpu_custom_call.1}
  #allocation0 [shape = 'u32[]', space=smem, size = 0x4, offset = 0x4, fixed_abs, tag = 'smem constant byte address 0x4 - core index']
  #allocation1 [shape = 'u32[144,128]{1,0:T(1,128)}', space=vmem, size = 0x12000, scoped, tag = 'internal scratch']
  %s0 = inlined_call_operand.hbm [shape: f32[4,512], index: 0, kind: input, shape index: {}]
  %s1 = inlined_call_operand.hbm [shape: f32[4,512], index: 1, kind: output, shape index: {}]
  %s2 = sld [smem:[#allocation0]]
  $region18: #{tpu_custom_call.1} parent=0
    _
  %s4 = ssub.s32 1, %s2
  %s5 = scalar_select 0, %s4, %s2
  $region1: #{tpu_custom_call.1} parent=0
    #allocation2 [shape = 'u8[8192]{0}', space=vmem, size = 0x2000, scoped, tag = 'input window, operand 0, single buffered']
    #allocation3 [shape = 's32[1]{0}', space=sflag, size = 0x4, scoped, tag = 'scoped memory for tpu_custom_call.1']
    #allocation4 [shape = 's32[1]{0}', space=sflag, size = 0x4, scoped, tag = 'scoped memory for tpu_custom_call.1']
    #allocation5 [shape = 'u8[8192]{0}', space=vmem, size = 0x2000, scoped, tag = 'output window, operand 0, single buffered']
    %6 = vsyncpa [#allocation3], 0
    %7 = vsyncpa [#allocation4], 0
    // Predicated region
    $region2: #{tpu_custom_call.1} parent=1 // pred_check
      _
    $region3: #{tpu_custom_call.1} parent=1 // pred_check_branch
      %9 = sbr.rel (0) target = $region5
    $region4: #{tpu_custom_call.1} parent=1 // pred_region
      %s11 = ssub.s32 256, 256
      %12 = vsyncadd [#allocation3], %s11
      %s14 = sshll.u32 [#allocation2], 4
      %s15 = int_to_ptr.vmem [resolvable:$true] %s14
      %17 = dma.hbm_to_vmem [thread:$0]  %s0, 256, %s15, [#allocation3]
    $region5: #{tpu_custom_call.1} parent=1 // pred_fallthru
      _
    // Predicated region
    $region6: #{tpu_custom_call.1} parent=1 // pred_check
      _
    $region7: #{tpu_custom_call.1} parent=1 // pred_check_branch
      %19 = sbr.rel (0) target = $region9
    $region8: #{tpu_custom_call.1} parent=1 // pred_region
      %20 = dma.done [#allocation3], 256
    $region9: #{tpu_custom_call.1} parent=1 // pred_fallthru
      _
    %v21 = vld [vmem:[#allocation2] sm:$0xff]
    %v22 = vld [vmem:[#allocation2 + $0x8] sm:$0xff]
    %v23 = vmax.f32 %v21, 0.0
    %v24 = vmax.f32 %v22, 0.0
    %v25 = vmul.f32 %v23, %v23
    %v26 = vmul.f32 %v24, %v24
    %27 = vst [vmem:[#allocation5] sm:$0xff] %v25
    %28 = vst [vmem:[#allocation5 + $0x8] sm:$0xff] %v26
    // Predicated region
    $region10: #{tpu_custom_call.1} parent=1 // pred_check
      _
    $region11: #{tpu_custom_call.1} parent=1 // pred_check_branch
      %30 = sbr.rel (0) target = $region13
    $region12: #{tpu_custom_call.1} parent=1 // pred_region
      %s32 = ssub.s32 256, 256
      %33 = vsyncadd [#allocation4], %s32
      %s35 = sshll.u32 [#allocation5], 4
      %s36 = int_to_ptr.vmem [resolvable:$true] %s35
      %38 = dma.vmem_to_hbm [thread:$0]  %s36, 256, %s1, [#allocation4]
    $region13: #{tpu_custom_call.1} parent=1 // pred_fallthru
      _
    // Predicated region
    $region14: #{tpu_custom_call.1} parent=1 // pred_check
      _
    $region15: #{tpu_custom_call.1} parent=1 // pred_check_branch
      %40 = sbr.rel (0) target = $region17
    $region16: #{tpu_custom_call.1} parent=1 // pred_region
      %41 = dma.done [#allocation4], 256
    $region17: #{tpu_custom_call.1} parent=1 // pred_fallthru
      _
    %42 = vsyncpa [#allocation3], 1
    %43 = vsyncpa [#allocation4], 1

</llo_original>
